<compile_context>
chip_gen: v6e
topology: v6e:2x2x1
jax: 0.10.0
libtpu: 0.0.40
codegen_flags: <defaults>
</compile_context>

<pallas_src>
import functools

import jax
import jax.numpy as jnp
from jax import lax
from jax.experimental import pallas as pl
from jax.experimental.pallas import tpu as pltpu


def _round_up(n, m):
    return ((n + m - 1) // m) * m


@functools.lru_cache(maxsize=1)
def _device_kind():
    try:
        return jax.devices()[0].device_kind.lower()
    except Exception:
        return ""


@functools.lru_cache(maxsize=1)
def _tile_b_cap():
    kind = _device_kind()
    # v5e MXU is 128x128 -> M=128 already saturates it; v6e/v7x are 256-wide.
    if "v5 lite" in kind or "v5lite" in kind or "v5e" in kind:
        return 128
    return 256


@functools.lru_cache(maxsize=1)
def _vmem_limit_bytes():
    kind = _device_kind()
    # v7x has 64 MiB physical VMEM per TensorCore -> leave headroom.
    if "v7" in kind:
        return 48 * 1024 * 1024
    # v5e / v6e have 128 MiB physical VMEM.
    return 64 * 1024 * 1024


# ----------------------------------------------------------------------------
# Kernels
# ----------------------------------------------------------------------------

def _mlp(emb_f32, w1t_ref, b1_ref, w2t_ref, b2_ref):
    # Linear -> SiLU -> Linear, bf16 weights, f32 accumulation / activations.
    h = jnp.dot(emb_f32.astype(w1t_ref.dtype), w1t_ref[...],
                preferred_element_type=jnp.float32) + b1_ref[...]
    h = h * jax.nn.sigmoid(h)                                     # SiLU in f32
    return jnp.dot(h.astype(w2t_ref.dtype), w2t_ref[...],
                   preferred_element_type=jnp.float32) + b2_ref[...]


def _cond_emb_2d_kernel(x_ref, e_ref, w1t_ref, b1_ref, w2t_ref, b2_ref, o_ref):
    # x_ref:   (TILE_B, C_pad) f32      e_ref:   (C_pad, D_pad) bf16
    # w1t_ref: (D_pad, D_pad) bf16      b1_ref:  (1, D_pad) f32
    # w2t_ref: (D_pad, D_pad) bf16      b2_ref:  (1, D_pad) f32
    # o_ref:   (TILE_B, D_pad) f32
    x = x_ref[...]
    s = jnp.sum(x, axis=1, keepdims=True)                         # (TILE_B, 1)
    pos = s > 0
    # Exact reciprocal on the EUP; rows with sum<=0 keep scale 1 (unchanged).
    inv = jnp.where(pos, pl.reciprocal(jnp.where(pos, s, 1.0), approx=False), 1.0)
    xn = x * inv

    emb = jnp.dot(xn.astype(e_ref.dtype), e_ref[...],
                  preferred_element_type=jnp.float32)
    o_ref[...] = _mlp(emb, w1t_ref, b1_ref, w2t_ref, b2_ref).astype(o_ref.dtype)


def _cond_emb_1d_kernel(idx_ref, e_ref, w1t_ref, b1_ref, w2t_ref, b2_ref, o_ref):
    # idx_ref: (TILE_B, 1) int32 — class indices for this batch tile.
    # Embedding lookup as a one-hot matmul on the MXU (E is resident in VMEM).
    idx = idx_ref[...]                                             # (TILE_B, 1)
    tb = idx.shape[0]
    c_pad = e_ref.shape[0]
    cls = lax.broadcasted_iota(jnp.int32, (tb, c_pad), 1)
    onehot = (cls == idx).astype(e_ref.dtype)                      # (TILE_B, C_pad)
    emb = jnp.dot(onehot, e_ref[...], preferred_element_type=jnp.float32)
    o_ref[...] = _mlp(emb, w1t_ref, b1_ref, w2t_ref, b2_ref).astype(o_ref.dtype)


# ----------------------------------------------------------------------------
# pallas_call wrappers
# ----------------------------------------------------------------------------

def _resident(shape):
    # Constant-index weight block: single VMEM buffer, DMA'd once, stays put.
    return pl.BlockSpec(shape, lambda i: (0, 0), pipeline_mode=pl.Buffered(1))


@functools.partial(jax.jit, static_argnames=("tile_b",))
def _run_2d(x_p, e_p, w1t_p, b1_p, w2t_p, b2_p, *, tile_b):
    b_pad, c_pad = x_p.shape
    d_pad = e_p.shape[1]
    return pl.pallas_call(
        _cond_emb_2d_kernel,
        out_shape=jax.ShapeDtypeStruct((b_pad, d_pad), jnp.float32),
        grid_spec=pltpu.PrefetchScalarGridSpec(
            num_scalar_prefetch=0,
            grid=(b_pad // tile_b,),
            in_specs=[
                pl.BlockSpec((tile_b, c_pad), lambda i: (i, 0)),   # x (pipelined)
                _resident((c_pad, d_pad)),                         # E
                _resident((d_pad, d_pad)),                         # W1^T
                _resident((1, d_pad)),                             # b1
                _resident((d_pad, d_pad)),                         # W2^T
                _resident((1, d_pad)),                             # b2
            ],
            out_specs=pl.BlockSpec((tile_b, d_pad), lambda i: (i, 0)),
        ),
        compiler_params=pltpu.CompilerParams(
            dimension_semantics=("parallel",),
            vmem_limit_bytes=_vmem_limit_bytes()),
    )(x_p, e_p, w1t_p, b1_p, w2t_p, b2_p)


@functools.partial(jax.jit, static_argnames=("tile_b",))
def _run_1d(idx_p, e_p, w1t_p, b1_p, w2t_p, b2_p, *, tile_b):
    b_pad = idx_p.shape[0]
    c_pad, d_pad = e_p.shape
    return pl.pallas_call(
        _cond_emb_1d_kernel,
        out_shape=jax.ShapeDtypeStruct((b_pad, d_pad), jnp.float32),
        grid_spec=pltpu.PrefetchScalarGridSpec(
            num_scalar_prefetch=0,
            grid=(b_pad // tile_b,),
            in_specs=[
                pl.BlockSpec((tile_b, 1), lambda i: (i, 0)),       # indices
                _resident((c_pad, d_pad)),                         # E
                _resident((d_pad, d_pad)),                         # W1^T
                _resident((1, d_pad)),                             # b1
                _resident((d_pad, d_pad)),                         # W2^T
                _resident((1, d_pad)),                             # b2
            ],
            out_specs=pl.BlockSpec((tile_b, d_pad), lambda i: (i, 0)),
        ),
        compiler_params=pltpu.CompilerParams(
            dimension_semantics=("parallel",),
            vmem_limit_bytes=_vmem_limit_bytes()),
    )(idx_p, e_p, w1t_p, b1_p, w2t_p, b2_p)


# ----------------------------------------------------------------------------
# Parameter preparation (done ONCE, not per forward call)
# ----------------------------------------------------------------------------

def prepare_params(params, compute_dtype=jnp.bfloat16):
    emb_w = params["emb_weight"]                 # (num_classes, dim)
    w1, b1 = params["w1"], params["b1"]          # PyTorch Linear: (out, in), (out,)
    w2, b2 = params["w2"], params["b2"]
    num_classes, dim = emb_w.shape
    c_pad = _round_up(num_classes, 128)
    d_pad = _round_up(dim, 128)

    def pad2(a, rows, cols):
        return jnp.pad(a, ((0, rows - a.shape[0]), (0, cols - a.shape[1])))

    def pad_bias(b):
        return jnp.pad(b.astype(jnp.float32), (0, d_pad - dim)).reshape(1, d_pad)

    return {
        "num_classes": num_classes,
        "dim": dim,
        "c_pad": c_pad,
        "d_pad": d_pad,
        "emb": pad2(emb_w.astype(jnp.float32), c_pad, d_pad).astype(compute_dtype),
        "w1t": pad2(jnp.transpose(w1).astype(jnp.float32), d_pad, d_pad).astype(compute_dtype),
        "b1": pad_bias(b1),
        "w2t": pad2(jnp.transpose(w2).astype(jnp.float32), d_pad, d_pad).astype(compute_dtype),
        "b2": pad_bias(b2),
    }


def discrete_condition_embedding(x, prepared):
    """Forward pass matching DiscreteConditionEmbedding.forward."""
    dim = prepared["dim"]
    c_pad = prepared["c_pad"]
    B = x.shape[0]
    tile_b = min(_tile_b_cap(), _round_up(B, 8))
    b_pad = _round_up(B, tile_b)

    if x.ndim == 1:
        idx = jnp.pad(x.astype(jnp.int32), (0, b_pad - B)).reshape(b_pad, 1)
        out = _run_1d(idx, prepared["emb"], prepared["w1t"], prepared["b1"],
                      prepared["w2t"], prepared["b2"], tile_b=tile_b)
    elif x.ndim == 2:
        x_p = jnp.pad(x.astype(jnp.float32),
                      ((0, b_pad - B), (0, c_pad - x.shape[1])))
        out = _run_2d(x_p, prepared["emb"], prepared["w1t"], prepared["b1"],
                      prepared["w2t"], prepared["b2"], tile_b=tile_b)
    else:
        raise ValueError(
            f"Input tensor x must be of shape (B,) or (B, num_classes), got {x.shape}"
        )
    return out[:B, :dim]


# ----------------------------------------------------------------------------
# Init + pure-JAX reference
# ----------------------------------------------------------------------------

def init_params(key, dim, num_classes):
    k_emb, k_w1, k_b1, k_w2, k_b2 = jax.random.split(key, 5)
    return {
        "emb_weight": jax.random.normal(k_emb, (num_classes, dim), jnp.float32),
        "w1": jax.random.normal(k_w1, (dim, dim), jnp.float32) * (1.0 / jnp.sqrt(dim)),
        "b1": jax.random.normal(k_b1, (dim,), jnp.float32) * 0.01,
        "w2": jax.random.normal(k_w2, (dim, dim), jnp.float32) * (1.0 / jnp.sqrt(dim)),
        "b2": jax.random.normal(k_b2, (dim,), jnp.float32) * 0.01,
    }


def _reference(x, params):
    """Pure-JAX (f32) reference of the PyTorch forward."""
    emb_w, w1, b1, w2, b2 = (
        params["emb_weight"], params["w1"], params["b1"], params["w2"], params["b2"]
    )
    if x.ndim == 1:
        emb = emb_w[x]
    else:
        s = x.sum(axis=1, keepdims=True)
        xn = jnp.where(s > 0, x / s, x)
        emb = xn @ emb_w
    h = emb @ w1.T + b1
    h = h * jax.nn.sigmoid(h)
    return h @ w2.T + b2


if __name__ == "__main__":
    dim = 32
    num_classes = 8
    B = 2

    key = jax.random.PRNGKey(0)
    k_params, k_x = jax.random.split(key)
    params = init_params(k_params, dim, num_classes)
    prepared = prepare_params(params)

    # 2-D branch: soft class weights; second row all zeros to exercise the
    # "sum <= 0 -> leave unchanged" path.
    x2d = jax.random.uniform(k_x, (B, num_classes), jnp.float32)
    x2d = x2d.at[1].set(0.0)

    # 1-D branch: integer class indices.
    x1d = jnp.array([0, 3], dtype=jnp.int32)

    out2d = jax.block_until_ready(discrete_condition_embedding(x2d, prepared))
    out1d = jax.block_until_ready(discrete_condition_embedding(x1d, prepared))

    ref2d = _reference(x2d, params)
    ref1d = _reference(x1d, params)

    assert out2d.shape == (B, dim) and out1d.shape == (B, dim)
    # bf16 weights with f32 accumulation -> loosened tolerance vs. f32 reference.
    assert jnp.allclose(out2d, ref2d, atol=5e-2, rtol=5e-2)
    assert jnp.allclose(out1d, ref1d, atol=5e-2, rtol=5e-2)

    print("KERNEL_OK")
</pallas_src>

<mosaic_0001>
module attributes {stable_mosaic.version = 11 : i64} {
  func.func @_cond_emb_2d_kernel(%arg0: i32, %arg1: memref<8x128xf32, #tpu.memory_space<vmem>>, %arg2: memref<128x128xbf16, #tpu.memory_space<vmem>>, %arg3: memref<128x128xbf16, #tpu.memory_space<vmem>>, %arg4: memref<1x128xf32, #tpu.memory_space<vmem>>, %arg5: memref<128x128xbf16, #tpu.memory_space<vmem>>, %arg6: memref<1x128xf32, #tpu.memory_space<vmem>>, %arg7: memref<8x128xf32, #tpu.memory_space<vmem>>) attributes {dimension_semantics = [#tpu.dimension_semantics<parallel>], iteration_bounds = array<i64: 1>, scalar_prefetch = 0 : i64, scratch_operands = 0 : i64, tpu.core_type = #tpu.core_type<tc>, window_params = [{transform_indices = @transform_0, window_bounds = array<i64: 8, 128>}, {pipeline_mode = #tpu.pipeline_mode<synchronous>, transform_indices = @transform_1, window_bounds = array<i64: 128, 128>}, {pipeline_mode = #tpu.pipeline_mode<synchronous>, transform_indices = @transform_2, window_bounds = array<i64: 128, 128>}, {pipeline_mode = #tpu.pipeline_mode<synchronous>, transform_indices = @transform_3, window_bounds = array<i64: 1, 128>}, {pipeline_mode = #tpu.pipeline_mode<synchronous>, transform_indices = @transform_4, window_bounds = array<i64: 128, 128>}, {pipeline_mode = #tpu.pipeline_mode<synchronous>, transform_indices = @transform_5, window_bounds = array<i64: 1, 128>}, {transform_indices = @transform_6, window_bounds = array<i64: 8, 128>}]} {
    %c0 = arith.constant 0 : index
    %c0_0 = arith.constant 0 : index
    %0 = vector.load %arg1[%c0, %c0_0] : memref<8x128xf32, #tpu.memory_space<vmem>>, vector<8x128xf32>
    %cst = arith.constant dense<0.000000e+00> : vector<8xf32>
    %1 = vector.multi_reduction <add>, %0, %cst [1] : vector<8x128xf32> to vector<8xf32>
    %2 = vector.shape_cast %1 : vector<8xf32> to vector<8x1xf32>
    %cst_1 = arith.constant 0.000000e+00 : f32
    %3 = vector.broadcast %cst_1 : f32 to vector<8x1xf32>
    %4 = arith.cmpf ogt, %2, %3 : vector<8x1xf32>
    %cst_2 = arith.constant 1.000000e+00 : f32
    %5 = vector.broadcast %cst_2 : f32 to vector<8x1xf32>
    %6 = arith.select %4, %2, %5 : vector<8x1xi1>, vector<8x1xf32>
    %7 = tpu.reciprocal %6 : vector<8x1xf32> -> vector<8x1xf32>
    %cst_3 = arith.constant 1.000000e+00 : f32
    %8 = vector.broadcast %cst_3 : f32 to vector<8x1xf32>
    %9 = arith.select %4, %7, %8 : vector<8x1xi1>, vector<8x1xf32>
    %10 = vector.broadcast %9 : vector<8x1xf32> to vector<8x128xf32>
    %11 = arith.mulf %0, %10 : vector<8x128xf32>
    %12 = arith.truncf %11 : vector<8x128xf32> to vector<8x128xbf16>
    %c0_4 = arith.constant 0 : index
    %c0_5 = arith.constant 0 : index
    %13 = vector.load %arg2[%c0_4, %c0_5] : memref<128x128xbf16, #tpu.memory_space<vmem>>, vector<128x128xbf16>
    %cst_6 = arith.constant dense<0.000000e+00> : vector<8x128xf32>
    %14 = tpu.matmul %12, %13, %cst_6 {dimension_numbers = #tpu.dot_dimension_numbers<[1], [0], [0], [1], [0, 0, 1, 1], [], []>} : vector<8x128xbf16>, vector<128x128xbf16>, vector<8x128xf32> -> vector<8x128xf32>
    %15 = arith.truncf %14 : vector<8x128xf32> to vector<8x128xbf16>
    %c0_7 = arith.constant 0 : index
    %c0_8 = arith.constant 0 : index
    %16 = vector.load %arg3[%c0_7, %c0_8] : memref<128x128xbf16, #tpu.memory_space<vmem>>, vector<128x128xbf16>
    %cst_9 = arith.constant dense<0.000000e+00> : vector<8x128xf32>
    %17 = tpu.matmul %15, %16, %cst_9 {dimension_numbers = #tpu.dot_dimension_numbers<[1], [0], [0], [1], [0, 0, 1, 1], [], []>} : vector<8x128xbf16>, vector<128x128xbf16>, vector<8x128xf32> -> vector<8x128xf32>
    %c0_10 = arith.constant 0 : index
    %c0_11 = arith.constant 0 : index
    %18 = vector.load %arg4[%c0_10, %c0_11] : memref<1x128xf32, #tpu.memory_space<vmem>>, vector<1x128xf32>
    %19 = vector.broadcast %18 : vector<1x128xf32> to vector<8x128xf32>
    %20 = arith.addf %17, %19 : vector<8x128xf32>
    %21 = arith.negf %20 : vector<8x128xf32>
    %22 = math.exp %21 : vector<8x128xf32>
    %cst_12 = arith.constant 1.000000e+00 : f32
    %23 = vector.broadcast %cst_12 : f32 to vector<8x128xf32>
    %24 = arith.addf %23, %22 : vector<8x128xf32>
    %25 = arith.divf %23, %24 : vector<8x128xf32>
    %26 = arith.mulf %20, %25 : vector<8x128xf32>
    %27 = arith.truncf %26 : vector<8x128xf32> to vector<8x128xbf16>
    %c0_13 = arith.constant 0 : index
    %c0_14 = arith.constant 0 : index
    %28 = vector.load %arg5[%c0_13, %c0_14] : memref<128x128xbf16, #tpu.memory_space<vmem>>, vector<128x128xbf16>
    %cst_15 = arith.constant dense<0.000000e+00> : vector<8x128xf32>
    %29 = tpu.matmul %27, %28, %cst_15 {dimension_numbers = #tpu.dot_dimension_numbers<[1], [0], [0], [1], [0, 0, 1, 1], [], []>} : vector<8x128xbf16>, vector<128x128xbf16>, vector<8x128xf32> -> vector<8x128xf32>
    %c0_16 = arith.constant 0 : index
    %c0_17 = arith.constant 0 : index
    %30 = vector.load %arg6[%c0_16, %c0_17] : memref<1x128xf32, #tpu.memory_space<vmem>>, vector<1x128xf32>
    %31 = vector.broadcast %30 : vector<1x128xf32> to vector<8x128xf32>
    %32 = arith.addf %29, %31 : vector<8x128xf32>
    %c0_18 = arith.constant 0 : index
    %c0_19 = arith.constant 0 : index
    %33 = vector.load %arg7[%c0_18, %c0_19] : memref<8x128xf32, #tpu.memory_space<vmem>>, vector<8x128xf32>
    tpu.vector_store %arg7[%c0_18, %c0_19], %32 {strides = array<i32>} : memref<8x128xf32, #tpu.memory_space<vmem>>, vector<8x128xf32>,
    return
  }
  func.func @transform_0(%arg0: i32) -> (i32, i32) {
    %c0_i32 = arith.constant 0 : i32
    %c0_i32_0 = arith.constant 0 : i32
    return %arg0, %c0_i32 : i32, i32
  }
  func.func @transform_1(%arg0: i32) -> (i32, i32) {
    %c0_i32 = arith.constant 0 : i32
    %c0_i32_0 = arith.constant 0 : i32
    %c0_i32_1 = arith.constant 0 : i32
    return %c0_i32, %c0_i32_0 : i32, i32
  }
  func.func @transform_2(%arg0: i32) -> (i32, i32) {
    %c0_i32 = arith.constant 0 : i32
    %c0_i32_0 = arith.constant 0 : i32
    %c0_i32_1 = arith.constant 0 : i32
    return %c0_i32, %c0_i32_0 : i32, i32
  }
  func.func @transform_3(%arg0: i32) -> (i32, i32) {
    %c0_i32 = arith.constant 0 : i32
    %c0_i32_0 = arith.constant 0 : i32
    %c0_i32_1 = arith.constant 0 : i32
    return %c0_i32, %c0_i32_0 : i32, i32
  }
  func.func @transform_4(%arg0: i32) -> (i32, i32) {
    %c0_i32 = arith.constant 0 : i32
    %c0_i32_0 = arith.constant 0 : i32
    %c0_i32_1 = arith.constant 0 : i32
    return %c0_i32, %c0_i32_0 : i32, i32
  }
  func.func @transform_5(%arg0: i32) -> (i32, i32) {
    %c0_i32 = arith.constant 0 : i32
    %c0_i32_0 = arith.constant 0 : i32
    %c0_i32_1 = arith.constant 0 : i32
    return %c0_i32, %c0_i32_0 : i32, i32
  }
  func.func @transform_6(%arg0: i32) -> (i32, i32) {
    %c0_i32 = arith.constant 0 : i32
    %c0_i32_0 = arith.constant 0 : i32
    return %arg0, %c0_i32 : i32, i32
  }
}

</mosaic_0001>

<llo_original>
// kernel: _run_2d.1
$region0: #{_run_2d.1}
  #allocation0 [shape = 'u32[]', space=smem, size = 0x4, offset = 0x4, fixed_abs, tag = 'smem constant byte address 0x4 - core index']
  #allocation1 [shape = 'u32[144,128]{1,0:T(1,128)}', space=vmem, size = 0x12000, scoped, tag = 'internal scratch']
  %s0 = inlined_call_operand.hbm [shape: f32[8,128], index: 0, kind: input, shape index: {}]
  %s1 = inlined_call_operand.hbm [shape: bf16[128,128], index: 1, kind: input, shape index: {}]
  %s2 = inlined_call_operand.hbm [shape: bf16[128,128], index: 2, kind: input, shape index: {}]
  %s3 = inlined_call_operand.vmem [shape: f32[1,128], index: 3, kind: input, shape index: {}]
  %s4 = inlined_call_operand.hbm [shape: bf16[128,128], index: 4, kind: input, shape index: {}]
  %s5 = inlined_call_operand.vmem [shape: f32[1,128], index: 5, kind: input, shape index: {}]
  %s6 = inlined_call_operand.hbm [shape: f32[8,128], index: 6, kind: output, shape index: {}]
  %s7 = sld [smem:[#allocation0]]
  $region50: #{_run_2d.1} parent=0
    _
  %s9 = ssub.s32 1, %s7
  %s10 = scalar_select 0, %s9, %s7
  $region1: #{_run_2d.1} parent=0
    #allocation2 [shape = 'u8[4096]{0}', space=vmem, size = 0x1000, scoped, tag = 'input window, operand 0, single buffered']
    #allocation3 [shape = 's32[1]{0}', space=sflag, size = 0x4, scoped, tag = 'scoped memory for _run_2d.1']
    #allocation4 [shape = 's32[1]{0}', space=sflag, size = 0x4, scoped, tag = 'scoped memory for _run_2d.1']
    #allocation5 [shape = 'u8[32768]{0}', space=vmem, size = 0x8000, scoped, tag = 'input window, operand 1, single buffered']
    #allocation6 [shape = 's32[1]{0}', space=sflag, size = 0x4, scoped, tag = 'scoped memory for _run_2d.1']
    #allocation7 [shape = 'u8[32768]{0}', space=vmem, size = 0x8000, scoped, tag = 'input window, operand 2, single buffered']
    #allocation8 [shape = 'u8[32768]{0}', space=vmem, size = 0x8000, scoped, tag = 'input window, operand 4, single buffered']
    #allocation9 [shape = 's32[1]{0}', space=sflag, size = 0x4, scoped, tag = 'scoped memory for _run_2d.1']
    #allocation10 [shape = 'u8[4096]{0}', space=vmem, size = 0x1000, scoped, tag = 'output window, operand 0, single buffered']
    %11 = vsyncpa [#allocation3], 0
    %12 = vsyncpa [#allocation6], 0
    %13 = vsyncpa [#allocation9], 0
    %14 = vsyncpa [#allocation4], 0
    // Predicated region
    $region2: #{_run_2d.1} parent=1 // pred_check
      _
    $region3: #{_run_2d.1} parent=1 // pred_check_branch
      %16 = sbr.rel (0) target = $region5
    $region4: #{_run_2d.1} parent=1 // pred_region
      %s18 = ssub.s32 128, 128
      %19 = vsyncadd [#allocation3], %s18
      %s21 = sshll.u32 [#allocation2], 4
      %s22 = int_to_ptr.vmem [resolvable:$true] %s21
      %24 = dma.hbm_to_vmem [thread:$0]  %s0, 128, %s22, [#allocation3]
    $region5: #{_run_2d.1} parent=1 // pred_fallthru
      _
    // Predicated region
    $region6: #{_run_2d.1} parent=1 // pred_check
      _
    $region7: #{_run_2d.1} parent=1 // pred_check_branch
      %26 = sbr.rel (0) target = $region9
    $region8: #{_run_2d.1} parent=1 // pred_region
      %s28 = ssub.s32 1024, 1024
      %29 = vsyncadd [#allocation6], %s28
      %s30 = sshll.u32 [#allocation5], 4
      %s31 = int_to_ptr.vmem [resolvable:$true] %s30
      %36 = dma.hbm_to_vmem [thread:$0]  %s1, 1024, %s31, [#allocation6], 64, 64, 4
    $region9: #{_run_2d.1} parent=1 // pred_fallthru
      _
    // Predicated region
    $region10: #{_run_2d.1} parent=1 // pred_check
      _
    $region11: #{_run_2d.1} parent=1 // pred_check_branch
      %38 = sbr.rel (0) target = $region13
    $region12: #{_run_2d.1} parent=1 // pred_region
      %s40 = ssub.s32 1024, 1024
      %41 = vsyncadd [#allocation6], %s40
      %s42 = sshll.u32 [#allocation7], 4
      %s43 = int_to_ptr.vmem [resolvable:$true] %s42
      %48 = dma.hbm_to_vmem [thread:$0]  %s2, 1024, %s43, [#allocation6], 64, 64, 4
    $region13: #{_run_2d.1} parent=1 // pred_fallthru
      _
    // Predicated region
    $region14: #{_run_2d.1} parent=1 // pred_check
      _
    $region15: #{_run_2d.1} parent=1 // pred_check_branch
      %50 = sbr.rel (0) target = $region17
    $region16: #{_run_2d.1} parent=1 // pred_region
      _
    $region17: #{_run_2d.1} parent=1 // pred_fallthru
      _
    // Predicated region
    $region18: #{_run_2d.1} parent=1 // pred_check
      _
    $region19: #{_run_2d.1} parent=1 // pred_check_branch
      %52 = sbr.rel (0) target = $region21
    $region20: #{_run_2d.1} parent=1 // pred_region
      %s54 = ssub.s32 1024, 1024
      %55 = vsyncadd [#allocation9], %s54
      %s56 = sshll.u32 [#allocation8], 4
      %s57 = int_to_ptr.vmem [resolvable:$true] %s56
      %62 = dma.hbm_to_vmem [thread:$0]  %s4, 1024, %s57, [#allocation9], 64, 64, 4
    $region21: #{_run_2d.1} parent=1 // pred_fallthru
      _
    // Predicated region
    $region22: #{_run_2d.1} parent=1 // pred_check
      _
    $region23: #{_run_2d.1} parent=1 // pred_check_branch
      %64 = sbr.rel (0) target = $region25
    $region24: #{_run_2d.1} parent=1 // pred_region
      _
    $region25: #{_run_2d.1} parent=1 // pred_fallthru
      _
    // Predicated region
    $region26: #{_run_2d.1} parent=1 // pred_check
      _
    $region27: #{_run_2d.1} parent=1 // pred_check_branch
      %66 = sbr.rel (0) target = $region29
    $region28: #{_run_2d.1} parent=1 // pred_region
      %67 = dma.done [#allocation3], 128
    $region29: #{_run_2d.1} parent=1 // pred_fallthru
      _
    // Predicated region
    $region30: #{_run_2d.1} parent=1 // pred_check
      _
    $region31: #{_run_2d.1} parent=1 // pred_check_branch
      %69 = sbr.rel (0) target = $region33
    $region32: #{_run_2d.1} parent=1 // pred_region
      %70 = dma.done [#allocation6], 1024
    $region33: #{_run_2d.1} parent=1 // pred_fallthru
      _
    // Predicated region
    $region34: #{_run_2d.1} parent=1 // pred_check
      _
    $region35: #{_run_2d.1} parent=1 // pred_check_branch
      %72 = sbr.rel (0) target = $region37
    $region36: #{_run_2d.1} parent=1 // pred_region
      %73 = dma.done [#allocation6], 1024
    $region37: #{_run_2d.1} parent=1 // pred_fallthru
      _
    // Predicated region
    $region38: #{_run_2d.1} parent=1 // pred_check
      _
    $region39: #{_run_2d.1} parent=1 // pred_check_branch
      %75 = sbr.rel (0) target = $region41
    $region40: #{_run_2d.1} parent=1 // pred_region
      %76 = dma.done [#allocation9], 1024
    $region41: #{_run_2d.1} parent=1 // pred_fallthru
      _
    %v78 = vld [vmem:[#allocation2] sm:$0xff]
    %79 = vadd.xlane.f32.xlu0 %v78
    %v80 = vpop.xlane.xlu0 %79
    %vm81 = vcmp.gt.f32.partialorder %v80, 0.0
    %v82 = vsel %vm81, %v80, 1.0
    %v83 = vrcp.pop %v82
    %v84 = vsel %vm81, %v83, 1.0
    %v85 = vmul.f32 %v78, %v84
    %v86 = vpack.c.bf16 %v85, %v85
    %v87 = vld [vmem:[#allocation5] sm:$0xf]
    %v88 = vld [vmem:[#allocation5 + $0x4] sm:$0xf]
    %v89 = vld [vmem:[#allocation5 + $0x8] sm:$0xf]
    %v90 = vld [vmem:[#allocation5 + $0xc] sm:$0xf]
    %v91 = vld [vmem:[#allocation5 + $0x10] sm:$0xf]
    %v92 = vld [vmem:[#allocation5 + $0x14] sm:$0xf]
    %v93 = vld [vmem:[#allocation5 + $0x18] sm:$0xf]
    %v94 = vld [vmem:[#allocation5 + $0x1c] sm:$0xf]
    %v95 = vld [vmem:[#allocation5 + $0x20] sm:$0xf]
    %v96 = vld [vmem:[#allocation5 + $0x24] sm:$0xf]
    %v97 = vld [vmem:[#allocation5 + $0x28] sm:$0xf]
    %v98 = vld [vmem:[#allocation5 + $0x2c] sm:$0xf]
    %v99 = vld [vmem:[#allocation5 + $0x30] sm:$0xf]
    %v100 = vld [vmem:[#allocation5 + $0x34] sm:$0xf]
    %v101 = vld [vmem:[#allocation5 + $0x38] sm:$0xf]
    %v102 = vld [vmem:[#allocation5 + $0x3c] sm:$0xf]
    %v119 = vunpack.c.l.b16 %v87
    %v120 = vunpack.c.l.b16 %v88
    %v121 = vunpack.c.l.b16 %v89
    %v122 = vunpack.c.l.b16 %v90
    %v123 = vunpack.c.l.b16 %v91
    %v124 = vunpack.c.l.b16 %v92
    %v125 = vunpack.c.l.b16 %v93
    %v126 = vunpack.c.l.b16 %v94
    %v127 = vunpack.c.l.b16 %v95
    %v128 = vunpack.c.l.b16 %v96
    %v129 = vunpack.c.l.b16 %v97
    %v130 = vunpack.c.l.b16 %v98
    %v131 = vunpack.c.l.b16 %v99
    %v132 = vunpack.c.l.b16 %v100
    %v133 = vunpack.c.l.b16 %v101
    %v134 = vunpack.c.l.b16 %v102
    %v135 = vpack.c.b16 %v120, %v119
    %v136 = vpack.c.b16 %v122, %v121
    %v137 = vpack.c.b16 %v124, %v123
    %v138 = vpack.c.b16 %v126, %v125
    %v139 = vpack.c.b16 %v128, %v127
    %v140 = vpack.c.b16 %v130, %v129
    %v141 = vpack.c.b16 %v132, %v131
    %v142 = vpack.c.b16 %v134, %v133
    %151 = vmatprep.subr.bf16.mxu0 0
    %152 = vmatpush1.bf16.msra.mxu0 %v142
    %153 = vmatprep.subr.bf16.mxu0 0
    %154 = vmatpush1.bf16.msra.mxu0 %v141
    %155 = vmatprep.subr.bf16.mxu0 0
    %156 = vmatpush1.bf16.msra.mxu0 %v140
    %157 = vmatprep.subr.bf16.mxu0 0
    %158 = vmatpush1.bf16.msra.mxu0 %v139
    %159 = vmatprep.subr.bf16.mxu0 0
    %160 = vmatpush1.bf16.msra.mxu0 %v138
    %161 = vmatprep.subr.bf16.mxu0 0
    %162 = vmatpush1.bf16.msra.mxu0 %v137
    %163 = vmatprep.subr.bf16.mxu0 0
    %164 = vmatpush1.bf16.msra.mxu0 %v136
    %165 = vmatprep.subr.bf16.mxu0 0
    %166 = vmatpush1.bf16.msra.mxu0 %v135
    %167 = vmatprep.subr.bf16.mxu0 0
    %168 = vmatpush2.bf16.msra.mxu0 0
    %169 = vmatprep.subr.bf16.mxu0 0
    %170 = vmatpush2.bf16.msra.mxu0 0
    %171 = vmatprep.subr.bf16.mxu0 0
    %172 = vmatpush2.bf16.msra.mxu0 0
    %173 = vmatprep.subr.bf16.mxu0 0
    %174 = vmatpush2.bf16.msra.mxu0 0
    %175 = vmatprep.subr.bf16.mxu0 0
    %176 = vmatpush2.bf16.msra.mxu0 0
    %177 = vmatprep.subr.bf16.mxu0 0
    %178 = vmatpush2.bf16.msra.mxu0 0
    %179 = vmatprep.subr.bf16.mxu0 0
    %180 = vmatpush2.bf16.msra.mxu0 0
    %181 = vmatprep.subr.bf16.mxu0 0
    %182 = vmatpush2.bf16.msra.mxu0 0
    %183 = vmatprep.mubr.bf16.mxu0 0
    %184 = vmatmul.mubr.bf16.gmra.mxu0 %v86
    %v185 = vpop.f32.mrf.mxu0
    %v186 = vadd.f32 0.0, %v185
    %v187 = vpop.f32.mrf.mxu0
    %v188 = vpop.f32.mrf.mxu0
    %v189 = vpop.f32.mrf.mxu0
    %190 = vdwg.mxu0
    %v191 = vpack.c.bf16 %v186, %v186
    %v192 = vld [vmem:[#allocation7] sm:$0xf]
    %v193 = vld [vmem:[#allocation7 + $0x4] sm:$0xf]
    %v194 = vld [vmem:[#allocation7 + $0x8] sm:$0xf]
    %v195 = vld [vmem:[#allocation7 + $0xc] sm:$0xf]
    %v196 = vld [vmem:[#allocation7 + $0x10] sm:$0xf]
    %v197 = vld [vmem:[#allocation7 + $0x14] sm:$0xf]
    %v198 = vld [vmem:[#allocation7 + $0x18] sm:$0xf]
    %v199 = vld [vmem:[#allocation7 + $0x1c] sm:$0xf]
    %v200 = vld [vmem:[#allocation7 + $0x20] sm:$0xf]
    %v201 = vld [vmem:[#allocation7 + $0x24] sm:$0xf]
    %v202 = vld [vmem:[#allocation7 + $0x28] sm:$0xf]
    %v203 = vld [vmem:[#allocation7 + $0x2c] sm:$0xf]
    %v204 = vld [vmem:[#allocation7 + $0x30] sm:$0xf]
    %v205 = vld [vmem:[#allocation7 + $0x34] sm:$0xf]
    %v206 = vld [vmem:[#allocation7 + $0x38] sm:$0xf]
    %v207 = vld [vmem:[#allocation7 + $0x3c] sm:$0xf]
    %v208 = vld [vmem:[%s3] sm:$0x1]
    %v210 = vlaneseq
    %v211 = vshrl.u32 %v210, 7
    %v212 = vsub.s32 0, %v211
    %v213 = vrot.slane %v208, %v212
    %v231 = vunpack.c.l.b16 %v192
    %v232 = vunpack.c.l.b16 %v193
    %v233 = vunpack.c.l.b16 %v194
    %v234 = vunpack.c.l.b16 %v195
    %v235 = vunpack.c.l.b16 %v196
    %v236 = vunpack.c.l.b16 %v197
    %v237 = vunpack.c.l.b16 %v198
    %v238 = vunpack.c.l.b16 %v199
    %v239 = vunpack.c.l.b16 %v200
    %v240 = vunpack.c.l.b16 %v201
    %v241 = vunpack.c.l.b16 %v202
    %v242 = vunpack.c.l.b16 %v203
    %v243 = vunpack.c.l.b16 %v204
    %v244 = vunpack.c.l.b16 %v205
    %v245 = vunpack.c.l.b16 %v206
    %v246 = vunpack.c.l.b16 %v207
    %v247 = vpack.c.b16 %v232, %v231
    %v248 = vpack.c.b16 %v234, %v233
    %v249 = vpack.c.b16 %v236, %v235
    %v250 = vpack.c.b16 %v238, %v237
    %v251 = vpack.c.b16 %v240, %v239
    %v252 = vpack.c.b16 %v242, %v241
    %v253 = vpack.c.b16 %v244, %v243
    %v254 = vpack.c.b16 %v246, %v245
    %263 = vmatprep.subr.bf16.mxu0 0
    %264 = vmatpush1.bf16.msra.mxu0 %v254
    %265 = vmatprep.subr.bf16.mxu0 0
    %266 = vmatpush1.bf16.msra.mxu0 %v253
    %267 = vmatprep.subr.bf16.mxu0 0
    %268 = vmatpush1.bf16.msra.mxu0 %v252
    %269 = vmatprep.subr.bf16.mxu0 0
    %270 = vmatpush1.bf16.msra.mxu0 %v251
    %271 = vmatprep.subr.bf16.mxu0 0
    %272 = vmatpush1.bf16.msra.mxu0 %v250
    %273 = vmatprep.subr.bf16.mxu0 0
    %274 = vmatpush1.bf16.msra.mxu0 %v249
    %275 = vmatprep.subr.bf16.mxu0 0
    %276 = vmatpush1.bf16.msra.mxu0 %v248
    %277 = vmatprep.subr.bf16.mxu0 0
    %278 = vmatpush1.bf16.msra.mxu0 %v247
    %279 = vmatprep.subr.bf16.mxu0 0
    %280 = vmatpush2.bf16.msra.mxu0 0
    %281 = vmatprep.subr.bf16.mxu0 0
    %282 = vmatpush2.bf16.msra.mxu0 0
    %283 = vmatprep.subr.bf16.mxu0 0
    %284 = vmatpush2.bf16.msra.mxu0 0
    %285 = vmatprep.subr.bf16.mxu0 0
    %286 = vmatpush2.bf16.msra.mxu0 0
    %287 = vmatprep.subr.bf16.mxu0 0
    %288 = vmatpush2.bf16.msra.mxu0 0
    %289 = vmatprep.subr.bf16.mxu0 0
    %290 = vmatpush2.bf16.msra.mxu0 0
    %291 = vmatprep.subr.bf16.mxu0 0
    %292 = vmatpush2.bf16.msra.mxu0 0
    %293 = vmatprep.subr.bf16.mxu0 0
    %294 = vmatpush2.bf16.msra.mxu0 0
    %295 = vmatprep.mubr.bf16.mxu0 0
    %296 = vmatmul.mubr.bf16.gmra.mxu0 %v191
    %v297 = vpop.f32.mrf.mxu0
    %v298 = vadd.f32 %v213, %v297
    %v299 = vpop.f32.mrf.mxu0
    %v300 = vpop.f32.mrf.mxu0
    %v301 = vpop.f32.mrf.mxu0
    %302 = vdwg.mxu0
    %v303 = vxor.u32 %v298, 2147483648
    %v304 = vmul.f32 %v303, 1.442695
    %v305 = vpow.pop %v304
    %v306 = vadd.f32 %v305, 1.0
    %v307 = vrcp.pop %v306
    %v308 = vmul.f32 1.0, %v307
    %v309 = vmul.f32 %v298, %v308
    %v310 = vpack.c.bf16 %v309, %v309
    %v311 = vld [vmem:[#allocation8] sm:$0xf]
    %v312 = vld [vmem:[#allocation8 + $0x4] sm:$0xf]
    %v313 = vld [vmem:[#allocation8 + $0x8] sm:$0xf]
    %v314 = vld [vmem:[#allocation8 + $0xc] sm:$0xf]
    %v315 = vld [vmem:[#allocation8 + $0x10] sm:$0xf]
    %v316 = vld [vmem:[#allocation8 + $0x14] sm:$0xf]
    %v317 = vld [vmem:[#allocation8 + $0x18] sm:$0xf]
    %v318 = vld [vmem:[#allocation8 + $0x1c] sm:$0xf]
    %v319 = vld [vmem:[#allocation8 + $0x20] sm:$0xf]
    %v320 = vld [vmem:[#allocation8 + $0x24] sm:$0xf]
    %v321 = vld [vmem:[#allocation8 + $0x28] sm:$0xf]
    %v322 = vld [vmem:[#allocation8 + $0x2c] sm:$0xf]
    %v323 = vld [vmem:[#allocation8 + $0x30] sm:$0xf]
    %v324 = vld [vmem:[#allocation8 + $0x34] sm:$0xf]
    %v325 = vld [vmem:[#allocation8 + $0x38] sm:$0xf]
    %v326 = vld [vmem:[#allocation8 + $0x3c] sm:$0xf]
    %v327 = vld [vmem:[%s5] sm:$0x1]
    %v329 = vlaneseq
    %v330 = vshrl.u32 %v329, 7
    %v331 = vsub.s32 0, %v330
    %v332 = vrot.slane %v327, %v331
    %v350 = vunpack.c.l.b16 %v311
    %v351 = vunpack.c.l.b16 %v312
    %v352 = vunpack.c.l.b16 %v313
    %v353 = vunpack.c.l.b16 %v314
    %v354 = vunpack.c.l.b16 %v315
    %v355 = vunpack.c.l.b16 %v316
    %v356 = vunpack.c.l.b16 %v317
    %v357 = vunpack.c.l.b16 %v318
    %v358 = vunpack.c.l.b16 %v319
    %v359 = vunpack.c.l.b16 %v320
    %v360 = vunpack.c.l.b16 %v321
    %v361 = vunpack.c.l.b16 %v322
    %v362 = vunpack.c.l.b16 %v323
    %v363 = vunpack.c.l.b16 %v324
    %v364 = vunpack.c.l.b16 %v325
    %v365 = vunpack.c.l.b16 %v326
    %v366 = vpack.c.b16 %v351, %v350
    %v367 = vpack.c.b16 %v353, %v352
    %v368 = vpack.c.b16 %v355, %v354
    %v369 = vpack.c.b16 %v357, %v356
    %v370 = vpack.c.b16 %v359, %v358
    %v371 = vpack.c.b16 %v361, %v360
    %v372 = vpack.c.b16 %v363, %v362
    %v373 = vpack.c.b16 %v365, %v364
    %382 = vmatprep.subr.bf16.mxu0 0
    %383 = vmatpush1.bf16.msra.mxu0 %v373
    %384 = vmatprep.subr.bf16.mxu0 0
    %385 = vmatpush1.bf16.msra.mxu0 %v372
    %386 = vmatprep.subr.bf16.mxu0 0
    %387 = vmatpush1.bf16.msra.mxu0 %v371
    %388 = vmatprep.subr.bf16.mxu0 0
    %389 = vmatpush1.bf16.msra.mxu0 %v370
    %390 = vmatprep.subr.bf16.mxu0 0
    %391 = vmatpush1.bf16.msra.mxu0 %v369
    %392 = vmatprep.subr.bf16.mxu0 0
    %393 = vmatpush1.bf16.msra.mxu0 %v368
    %394 = vmatprep.subr.bf16.mxu0 0
    %395 = vmatpush1.bf16.msra.mxu0 %v367
    %396 = vmatprep.subr.bf16.mxu0 0
    %397 = vmatpush1.bf16.msra.mxu0 %v366
    %398 = vmatprep.subr.bf16.mxu0 0
    %399 = vmatpush2.bf16.msra.mxu0 0
    %400 = vmatprep.subr.bf16.mxu0 0
    %401 = vmatpush2.bf16.msra.mxu0 0
    %402 = vmatprep.subr.bf16.mxu0 0
    %403 = vmatpush2.bf16.msra.mxu0 0
    %404 = vmatprep.subr.bf16.mxu0 0
    %405 = vmatpush2.bf16.msra.mxu0 0
    %406 = vmatprep.subr.bf16.mxu0 0
    %407 = vmatpush2.bf16.msra.mxu0 0
    %408 = vmatprep.subr.bf16.mxu0 0
    %409 = vmatpush2.bf16.msra.mxu0 0
    %410 = vmatprep.subr.bf16.mxu0 0
    %411 = vmatpush2.bf16.msra.mxu0 0
    %412 = vmatprep.subr.bf16.mxu0 0
    %413 = vmatpush2.bf16.msra.mxu0 0
    %414 = vmatprep.mubr.bf16.mxu0 0
    %415 = vmatmul.mubr.bf16.gmra.mxu0 %v310
    %v416 = vpop.f32.mrf.mxu0
    %v417 = vadd.f32 %v332, %v416
    %v418 = vpop.f32.mrf.mxu0
    %v419 = vpop.f32.mrf.mxu0
    %v420 = vpop.f32.mrf.mxu0
    %421 = vdwg.mxu0
    %422 = vst [vmem:[#allocation10] sm:$0xff] %v417
    // Predicated region
    $region42: #{_run_2d.1} parent=1 // pred_check
      _
    $region43: #{_run_2d.1} parent=1 // pred_check_branch
      %424 = sbr.rel (0) target = $region45
    $region44: #{_run_2d.1} parent=1 // pred_region
      %s426 = ssub.s32 128, 128
      %427 = vsyncadd [#allocation4], %s426
      %s429 = sshll.u32 [#allocation10], 4
      %s430 = int_to_ptr.vmem [resolvable:$true] %s429
      %432 = dma.vmem_to_hbm [thread:$0]  %s430, 128, %s6, [#allocation4]
    $region45: #{_run_2d.1} parent=1 // pred_fallthru
      _
    // Predicated region
    $region46: #{_run_2d.1} parent=1 // pred_check
      _
    $region47: #{_run_2d.1} parent=1 // pred_check_branch
      %434 = sbr.rel (0) target = $region49
    $region48: #{_run_2d.1} parent=1 // pred_region
      %435 = dma.done [#allocation4], 128
    $region49: #{_run_2d.1} parent=1 // pred_fallthru
      _
    %436 = vsyncpa [#allocation3], 1
    %437 = vsyncpa [#allocation6], 1
    %438 = vsyncpa [#allocation9], 1
    %439 = vsyncpa [#allocation4], 1

</llo_original>
